<compile_context>
chip_gen: v7x
topology: tpu7x:2x2x1
jax: 0.10.0
libtpu: 0.0.40
codegen_flags: <defaults>
</compile_context>

<pallas_src>
import jax
import jax.numpy as jnp
from jax.experimental import pallas as pl
from jax.experimental.pallas import tpu as pltpu

LANE = 128
SUBLANE = 8


def _round_up(x, m):
    return (x + m - 1) // m * m


def _choose_pack(batch_elems, num_nodes, target_rows=LANE):
    """Pick how many graph-batch elements to pack per A_hat tile."""
    pack = max(1, target_rows // max(num_nodes, 1))
    pack = min(pack, batch_elems)
    # Keep the grid >= 2 steps when possible (v7x megacore sharding).
    while pack > 1 and pl.cdiv(batch_elems, pack) < 2:
        pack //= 2
    return max(pack, 1)


def gcn_match_kernel(a_ref, x_ref, p_ref, w1_ref, b1_ref, w2_ref, b2_ref, o_ref):
    a = a_ref[...]  # [Nt, Nt] bf16 block-diagonal A_hat, reused by both layers

    # conv1, reordered: (A_hat @ X) @ W1 + b1, ReLU   (F << H)
    ax = jnp.dot(a, x_ref[...], preferred_element_type=jnp.float32)          # [Nt, F]
    h1 = jnp.dot(ax.astype(jnp.bfloat16), w1_ref[...],
                 preferred_element_type=jnp.float32)                          # [Nt, Hp]
    h1 = jnp.maximum(h1 + b1_ref[...], 0.0)

    # conv2: A_hat @ (H1 @ W2) + b2
    hw2 = jnp.dot(h1.astype(jnp.bfloat16), w2_ref[...],
                  preferred_element_type=jnp.float32)                         # [Nt, Hp]
    h2 = jnp.dot(a, hw2.astype(jnp.bfloat16),
                 preferred_element_type=jnp.float32) + b2_ref[...]            # [Nt, Hp]

    # global_mean_pool: P @ H2 in f32 (tiny matmul, keeps mean weights exact)
    o_ref[...] = jnp.dot(p_ref[...], h2, preferred_element_type=jnp.float32)  # [Gt, Hp]


def graph_matching_forward(a_hat, x, pool, w1, b1, w2, b2, pack_size=None):
    """Batched forward.

    a_hat: [B, N, N] f32   normalized adjacency per graph-batch element
    x:     [B, N, F] f32   node features
    pool:  [B, G, N] f32   mean-pool matrix per graph-batch element
    w1:[F,H] b1:[H] w2:[H,H] b2:[H]  shared GCN parameters
    returns [B, G, H] f32
    """
    B, N, F = x.shape
    G = pool.shape[1]
    H = w1.shape[1]

    PACK = _choose_pack(B, N) if pack_size is None else pack_size
    NB = pl.cdiv(B, PACK)        # grid steps
    Bp = NB * PACK
    Nt = PACK * N                # packed node rows per tile (128 in the demo)
    Gt = PACK * G                # packed graph rows per tile
    Hp = _round_up(H, LANE)      # lane-dense hidden/output channel dim

    bf16 = jnp.bfloat16

    # Pad B to a multiple of PACK with empty elements (exact, see module docstring).
    if Bp != B:
        a_hat = jnp.concatenate(
            [a_hat, jnp.zeros((Bp - B, N, N), a_hat.dtype)], axis=0)
        x = jnp.concatenate([x, jnp.zeros((Bp - B, N, F), x.dtype)], axis=0)
        pool = jnp.concatenate([pool, jnp.zeros((Bp - B, G, N), pool.dtype)], axis=0)

    # Block-diagonal packing of PACK graph-batch elements per tile.
    eye = jnp.eye(PACK, dtype=jnp.float32)
    a4 = a_hat.reshape(NB, PACK, N, N).astype(jnp.float32)
    a_p = jnp.einsum('npij,pq->npiqj', a4, eye).reshape(NB, Nt, Nt).astype(bf16)
    x_p = x.reshape(NB, Nt, F).astype(bf16)          # free leading-dim merge, no zero fill
    p4 = pool.reshape(NB, PACK, G, N).astype(jnp.float32)
    p_p = jnp.einsum('npgi,pq->npgqi', p4, eye).reshape(NB, Gt, Nt)   # stays f32

    w1_p = jnp.zeros((F, Hp), bf16).at[:, :H].set(w1.astype(bf16))
    w2_p = jnp.zeros((Hp, Hp), bf16).at[:H, :H].set(w2.astype(bf16))
    b1_p = jnp.zeros((1, Hp), jnp.float32).at[:, :H].set(b1.reshape(1, H))
    b2_p = jnp.zeros((1, Hp), jnp.float32).at[:, :H].set(b2.reshape(1, H))

    # TODO(synk): for very large graphs, replace the dense O(Nt^2) A_hat matmul with a
    # scalar-prefetched CSR gather/accumulate, and add a K-tiled "arbitrary" grid axis
    # over A_hat's columns once 2*Nt^2*2B exceeds v7x's 64 MiB VMEM (Nt >= ~4096).
    out = pl.pallas_call(
        gcn_match_kernel,
        out_shape=jax.ShapeDtypeStruct((NB, Gt, Hp), jnp.float32),
        grid=(NB,),
        in_specs=[
            pl.BlockSpec((None, Nt, Nt), lambda b: (b, 0, 0)),   # A_hat  (per pack)
            pl.BlockSpec((None, Nt, F), lambda b: (b, 0, 0)),    # X      (per pack)
            pl.BlockSpec((None, Gt, Nt), lambda b: (b, 0, 0)),   # pool   (per pack, f32)
            pl.BlockSpec((F, Hp), lambda b: (0, 0)),             # W1     (resident)
            pl.BlockSpec((1, Hp), lambda b: (0, 0)),             # b1     (resident)
            pl.BlockSpec((Hp, Hp), lambda b: (0, 0)),            # W2     (resident)
            pl.BlockSpec((1, Hp), lambda b: (0, 0)),             # b2     (resident)
        ],
        out_specs=pl.BlockSpec((None, Gt, Hp), lambda b: (b, 0, 0)),
        compiler_params=pltpu.CompilerParams(
            dimension_semantics=("parallel",),   # shard packs across TCs (v7x)
        ),
    )(a_p, x_p, p_p, w1_p, b1_p, w2_p, b2_p)

    # [NB, PACK*G, Hp] -> [Bp, G, Hp] -> slice padding / extra channels.
    return out.reshape(Bp, G, Hp)[:B, :, :H]


def build_normalized_adjacency(edge_index, num_nodes):
    """GCNConv normalization: A_hat = D^{-1/2} (A + I) D^{-1/2} (dense, glue)."""
    src, dst = edge_index[0], edge_index[1]
    a = jnp.zeros((num_nodes, num_nodes), jnp.float32)
    a = a.at[dst, src].set(1.0)                      # message src -> dst
    eye = jnp.arange(num_nodes)
    a = a.at[eye, eye].set(1.0)                      # self loops
    deg = jnp.sum(a, axis=1)
    dinv = jnp.where(deg > 0, 1.0 / jnp.sqrt(deg), 0.0)
    return dinv[:, None] * a * dinv[None, :]


def build_pool_matrix(batch, num_graphs):
    """global_mean_pool as a dense [G, N] matrix (glue)."""
    onehot = (batch[None, :] == jnp.arange(num_graphs)[:, None]).astype(jnp.float32)
    counts = jnp.maximum(jnp.sum(onehot, axis=1, keepdims=True), 1.0)
    return onehot / counts


def glorot(key, shape):
    fan_in, fan_out = shape
    limit = jnp.sqrt(6.0 / (fan_in + fan_out))
    return jax.random.uniform(key, shape, jnp.float32, -limit, limit)


if __name__ == "__main__":
    # B independent graph-batch elements, each with N nodes, F features, G graphs.
    B, N, F, H, G = 16, 16, 8, 32, 2
    key = jax.random.PRNGKey(0)
    kx, kw1, kw2, kb1, kb2 = jax.random.split(key, 5)

    # Node features differ per batch element.
    x = jax.random.normal(kx, (B, N, F), jnp.float32)

    # Deterministic undirected edge set: a ring within each graph (shared topology).
    edges = []
    for g in range(G):
        base = g * (N // G)
        for i in range(N // G):
            a = base + i
            b = base + (i + 1) % (N // G)
            edges.append((a, b))
            edges.append((b, a))
    edge_index = jnp.array(edges, jnp.int32).T          # [2, E]
    batch = jnp.repeat(jnp.arange(G, dtype=jnp.int32), N // G)

    # Shared GCNConv parameters (glorot weights, small random biases).
    w1 = glorot(kw1, (F, H))
    b1 = 0.1 * jax.random.normal(kb1, (H,), jnp.float32)
    w2 = glorot(kw2, (H, H))
    b2 = 0.1 * jax.random.normal(kb2, (H,), jnp.float32)

    a_hat = build_normalized_adjacency(edge_index, N)    # [N, N]
    pool = build_pool_matrix(batch, G)                   # [G, N]
    a_hat_b = jnp.broadcast_to(a_hat, (B, N, N))
    pool_b = jnp.broadcast_to(pool, (B, G, N))

    out = graph_matching_forward(a_hat_b, x, pool_b, w1, b1, w2, b2)
    out = jax.block_until_ready(out)

    # Pure-JAX f32 reference (original op order / module semantics).
    def ref_single(a, xb, pb):
        h1 = jnp.maximum(a @ (xb @ w1) + b1[None, :], 0.0)
        h2 = a @ (h1 @ w2) + b2[None, :]
        return pb @ h2

    ref = jax.vmap(ref_single, in_axes=(0, 0, 0))(a_hat_b, x, pool_b)

    assert out.shape == (B, G, H)
    # bf16 operands in the kernel vs f32 reference -> loose tolerance.
    assert jnp.allclose(out, ref, atol=5e-2, rtol=5e-2), (
        float(jnp.max(jnp.abs(out - ref))))

    print("KERNEL_OK")
</pallas_src>

<mosaic_0001>
module attributes {stable_mosaic.version = 11 : i64} {
  func.func @gcn_match_kernel(%arg0: i32, %arg1: memref<1x128x128xbf16, #tpu.memory_space<vmem>>, %arg2: memref<1x128x8xbf16, #tpu.memory_space<vmem>>, %arg3: memref<1x16x128xf32, #tpu.memory_space<vmem>>, %arg4: memref<8x128xbf16, #tpu.memory_space<vmem>>, %arg5: memref<1x128xf32, #tpu.memory_space<vmem>>, %arg6: memref<128x128xbf16, #tpu.memory_space<vmem>>, %arg7: memref<1x128xf32, #tpu.memory_space<vmem>>, %arg8: memref<1x16x128xf32, #tpu.memory_space<vmem>>) attributes {dimension_semantics = [#tpu.dimension_semantics<parallel>], iteration_bounds = array<i64: 2>, scalar_prefetch = 0 : i64, scratch_operands = 0 : i64, tpu.core_type = #tpu.core_type<tc>, window_params = [{transform_indices = @transform_0, window_bounds = array<i64: 1, 128, 128>}, {transform_indices = @transform_1, window_bounds = array<i64: 1, 128, 8>}, {transform_indices = @transform_2, window_bounds = array<i64: 1, 16, 128>}, {pipeline_mode = #tpu.pipeline_mode<synchronous>, transform_indices = @transform_3, window_bounds = array<i64: 8, 128>}, {pipeline_mode = #tpu.pipeline_mode<synchronous>, transform_indices = @transform_4, window_bounds = array<i64: 1, 128>}, {pipeline_mode = #tpu.pipeline_mode<synchronous>, transform_indices = @transform_5, window_bounds = array<i64: 128, 128>}, {pipeline_mode = #tpu.pipeline_mode<synchronous>, transform_indices = @transform_6, window_bounds = array<i64: 1, 128>}, {transform_indices = @transform_7, window_bounds = array<i64: 1, 16, 128>}]} {
    %c0 = arith.constant 0 : index
    %c0_0 = arith.constant 0 : index
    %c0_1 = arith.constant 0 : index
    %0 = vector.load %arg1[%c0, %c0_0, %c0_1] : memref<1x128x128xbf16, #tpu.memory_space<vmem>>, vector<1x128x128xbf16>
    %1 = vector.shape_cast %0 : vector<1x128x128xbf16> to vector<128x128xbf16>
    %c0_2 = arith.constant 0 : index
    %c0_3 = arith.constant 0 : index
    %c0_4 = arith.constant 0 : index
    %2 = vector.load %arg2[%c0_2, %c0_3, %c0_4] : memref<1x128x8xbf16, #tpu.memory_space<vmem>>, vector<1x128x8xbf16>
    %3 = vector.shape_cast %2 : vector<1x128x8xbf16> to vector<128x8xbf16>
    %cst = arith.constant dense<0.000000e+00> : vector<128x8xf32>
    %4 = tpu.matmul %1, %3, %cst {dimension_numbers = #tpu.dot_dimension_numbers<[1], [0], [0], [1], [0, 0, 1, 1], [], []>} : vector<128x128xbf16>, vector<128x8xbf16>, vector<128x8xf32> -> vector<128x8xf32>
    %5 = arith.truncf %4 : vector<128x8xf32> to vector<128x8xbf16>
    %c0_5 = arith.constant 0 : index
    %c0_6 = arith.constant 0 : index
    %6 = vector.load %arg4[%c0_5, %c0_6] : memref<8x128xbf16, #tpu.memory_space<vmem>>, vector<8x128xbf16>
    %cst_7 = arith.constant dense<0.000000e+00> : vector<128x128xf32>
    %7 = tpu.matmul %5, %6, %cst_7 {dimension_numbers = #tpu.dot_dimension_numbers<[1], [0], [0], [1], [0, 0, 1, 1], [], []>} : vector<128x8xbf16>, vector<8x128xbf16>, vector<128x128xf32> -> vector<128x128xf32>
    %c0_8 = arith.constant 0 : index
    %c0_9 = arith.constant 0 : index
    %8 = vector.load %arg5[%c0_8, %c0_9] : memref<1x128xf32, #tpu.memory_space<vmem>>, vector<1x128xf32>
    %9 = vector.broadcast %8 : vector<1x128xf32> to vector<128x128xf32>
    %10 = arith.addf %7, %9 : vector<128x128xf32>
    %cst_10 = arith.constant 0.000000e+00 : f32
    %11 = vector.broadcast %cst_10 : f32 to vector<128x128xf32>
    %12 = arith.maximumf %10, %11 : vector<128x128xf32>
    %13 = arith.truncf %12 : vector<128x128xf32> to vector<128x128xbf16>
    %c0_11 = arith.constant 0 : index
    %c0_12 = arith.constant 0 : index
    %14 = vector.load %arg6[%c0_11, %c0_12] : memref<128x128xbf16, #tpu.memory_space<vmem>>, vector<128x128xbf16>
    %cst_13 = arith.constant dense<0.000000e+00> : vector<128x128xf32>
    %15 = tpu.matmul %13, %14, %cst_13 {dimension_numbers = #tpu.dot_dimension_numbers<[1], [0], [0], [1], [0, 0, 1, 1], [], []>} : vector<128x128xbf16>, vector<128x128xbf16>, vector<128x128xf32> -> vector<128x128xf32>
    %16 = arith.truncf %15 : vector<128x128xf32> to vector<128x128xbf16>
    %cst_14 = arith.constant dense<0.000000e+00> : vector<128x128xf32>
    %17 = tpu.matmul %1, %16, %cst_14 {dimension_numbers = #tpu.dot_dimension_numbers<[1], [0], [0], [1], [0, 0, 1, 1], [], []>} : vector<128x128xbf16>, vector<128x128xbf16>, vector<128x128xf32> -> vector<128x128xf32>
    %c0_15 = arith.constant 0 : index
    %c0_16 = arith.constant 0 : index
    %18 = vector.load %arg7[%c0_15, %c0_16] : memref<1x128xf32, #tpu.memory_space<vmem>>, vector<1x128xf32>
    %19 = vector.broadcast %18 : vector<1x128xf32> to vector<128x128xf32>
    %20 = arith.addf %17, %19 : vector<128x128xf32>
    %c0_17 = arith.constant 0 : index
    %c0_18 = arith.constant 0 : index
    %c0_19 = arith.constant 0 : index
    %21 = vector.load %arg3[%c0_17, %c0_18, %c0_19] : memref<1x16x128xf32, #tpu.memory_space<vmem>>, vector<1x16x128xf32>
    %22 = vector.shape_cast %21 : vector<1x16x128xf32> to vector<16x128xf32>
    %cst_20 = arith.constant dense<0.000000e+00> : vector<16x128xf32>
    %23 = tpu.matmul %22, %20, %cst_20 {dimension_numbers = #tpu.dot_dimension_numbers<[1], [0], [0], [1], [0, 0, 1, 1], [], []>} : vector<16x128xf32>, vector<128x128xf32>, vector<16x128xf32> -> vector<16x128xf32>
    %c0_21 = arith.constant 0 : index
    %c0_22 = arith.constant 0 : index
    %c0_23 = arith.constant 0 : index
    %24 = vector.load %arg8[%c0_21, %c0_22, %c0_23] : memref<1x16x128xf32, #tpu.memory_space<vmem>>, vector<1x16x128xf32>
    %25 = vector.shape_cast %24 : vector<1x16x128xf32> to vector<16x128xf32>
    %26 = vector.shape_cast %23 : vector<16x128xf32> to vector<1x16x128xf32>
    tpu.vector_store %arg8[%c0_21, %c0_22, %c0_23], %26 {strides = array<i32>} : memref<1x16x128xf32, #tpu.memory_space<vmem>>, vector<1x16x128xf32>,
    return
  }
  func.func @transform_0(%arg0: i32) -> (i32, i32, i32) {
    %c0_i32 = arith.constant 0 : i32
    %c0_i32_0 = arith.constant 0 : i32
    %c0_i32_1 = arith.constant 0 : i32
    return %arg0, %c0_i32, %c0_i32_0 : i32, i32, i32
  }
  func.func @transform_1(%arg0: i32) -> (i32, i32, i32) {
    %c0_i32 = arith.constant 0 : i32
    %c0_i32_0 = arith.constant 0 : i32
    %c0_i32_1 = arith.constant 0 : i32
    return %arg0, %c0_i32, %c0_i32_0 : i32, i32, i32
  }
  func.func @transform_2(%arg0: i32) -> (i32, i32, i32) {
    %c0_i32 = arith.constant 0 : i32
    %c0_i32_0 = arith.constant 0 : i32
    %c0_i32_1 = arith.constant 0 : i32
    return %arg0, %c0_i32, %c0_i32_0 : i32, i32, i32
  }
  func.func @transform_3(%arg0: i32) -> (i32, i32) {
    %c0_i32 = arith.constant 0 : i32
    %c0_i32_0 = arith.constant 0 : i32
    %c0_i32_1 = arith.constant 0 : i32
    return %c0_i32, %c0_i32_0 : i32, i32
  }
  func.func @transform_4(%arg0: i32) -> (i32, i32) {
    %c0_i32 = arith.constant 0 : i32
    %c0_i32_0 = arith.constant 0 : i32
    %c0_i32_1 = arith.constant 0 : i32
    return %c0_i32, %c0_i32_0 : i32, i32
  }
  func.func @transform_5(%arg0: i32) -> (i32, i32) {
    %c0_i32 = arith.constant 0 : i32
    %c0_i32_0 = arith.constant 0 : i32
    %c0_i32_1 = arith.constant 0 : i32
    return %c0_i32, %c0_i32_0 : i32, i32
  }
  func.func @transform_6(%arg0: i32) -> (i32, i32) {
    %c0_i32 = arith.constant 0 : i32
    %c0_i32_0 = arith.constant 0 : i32
    %c0_i32_1 = arith.constant 0 : i32
    return %c0_i32, %c0_i32_0 : i32, i32
  }
  func.func @transform_7(%arg0: i32) -> (i32, i32, i32) {
    %c0_i32 = arith.constant 0 : i32
    %c0_i32_0 = arith.constant 0 : i32
    %c0_i32_1 = arith.constant 0 : i32
    return %arg0, %c0_i32, %c0_i32_0 : i32, i32, i32
  }
}

</mosaic_0001>

<llo_original>
// kernel: tpu_custom_call.1
$region0: #{tpu_custom_call.1}
  #allocation0 [shape = 'u32[]', space=smem, size = 0x4, offset = 0x4, fixed_abs, tag = 'smem constant byte address 0x4 - core index']
  #allocation1 [shape = 'u32[144,128]{1,0:T(1,128)}', space=vmem, size = 0x12000, scoped, tag = 'internal scratch']
  %s0 = inlined_call_operand.vmem [shape: bf16[2,128,128], index: 0, kind: input, shape index: {}]
  %s1 = inlined_call_operand.vmem [shape: bf16[2,128,8], index: 1, kind: input, shape index: {}]
  %s2 = inlined_call_operand.hbm [shape: f32[2,16,128], index: 2, kind: input, shape index: {}]
  %s3 = inlined_call_operand.vmem [shape: bf16[8,128], index: 3, kind: input, shape index: {}]
  %s4 = inlined_call_operand.vmem [shape: f32[1,128], index: 4, kind: input, shape index: {}]
  %s5 = inlined_call_operand.hbm [shape: bf16[128,128], index: 5, kind: input, shape index: {}]
  %s6 = inlined_call_operand.vmem [shape: f32[1,128], index: 6, kind: input, shape index: {}]
  %s7 = inlined_call_operand.hbm [shape: f32[2,16,128], index: 7, kind: output, shape index: {}]
  %s8 = sld [smem:[#allocation0]]
  $region69: #{tpu_custom_call.1} parent=0
    _
  %s10 = ssub.s32 1, %s8
  %s11 = scalar_select 0, %s10, %s8
  $region1: #{tpu_custom_call.1} parent=0
    #allocation2 [shape = 'u8[16384]{0}', space=vmem, size = 0x4000, scoped, tag = 'input window, operand 2']
    #allocation3 [shape = 's32[2]{0}', space=sflag, size = 0x8, scoped, tag = 'scoped memory for tpu_custom_call.1']
    #allocation4 [shape = 's32[2]{0}', space=sflag, size = 0x8, scoped, tag = 'scoped memory for tpu_custom_call.1']
    #allocation5 [shape = 'u8[32768]{0}', space=vmem, size = 0x8000, scoped, tag = 'input window, operand 5, single buffered']
    #allocation6 [shape = 's32[1]{0}', space=sflag, size = 0x4, scoped, tag = 'scoped memory for tpu_custom_call.1']
    #allocation7 [shape = 'u8[16384]{0}', space=vmem, size = 0x4000, scoped, tag = 'output window, operand 0']
    %12 = vsyncpa [#allocation3], 0
    %s13 = scalar_lea.sflag [#allocation3], 1
    %14 = vsyncpa %s13, 0
    %15 = vsyncpa [#allocation6], 0
    %16 = vsyncpa [#allocation4], 0
    %s17 = scalar_lea.sflag [#allocation4], 1
    %18 = vsyncpa %s17, 0
    loop: start=0, step=1, limit=4
    $region2: #{tpu_custom_call.1} parent=1 // loop_pre_header
      _
    $region3: #{tpu_custom_call.1} parent=1 // loop_header
      %s20 = sphi 0, %s24
      %p21 = scmp.ge.s32.totalorder %s20, 4
      %s30 = sphi 0, %s32
      %s33 = sphi 0, %s30
      %s34 = sphi 0, %s33
      %s50 = sphi 0, %s34
      %s56 = sphi 0, %s58
      %s59 = sphi 0, %s56
      %s60 = sphi 0, %s59
      %s76 = sphi 0, %s60
      %s82 = sphi 0, %s84
      %s85 = sphi 0, %s82
      %s86 = sphi 0, %s85
      %s102 = sphi 0, %s86
      %s106 = sphi 0, %s106
      %s108 = sphi 0, %s106
      %s109 = sphi 0, %s108
      %s123 = sphi 0, %s109
      %s127 = sphi 0, %s127
      %s129 = sphi 0, %s127
      %s130 = sphi 0, %s129
      %s144 = sphi 0, %s130
      %s148 = sphi 0, %s148
      %s150 = sphi 0, %s148
      %s151 = sphi 0, %s150
      %s165 = sphi 0, %s151
      %s169 = sphi 0, %s169
      %s171 = sphi 0, %s169
      %s172 = sphi 0, %s171
      %s186 = sphi 0, %s172
      %s192 = sphi 0, %s194
      %s195 = sphi 0, %s192
      %s196 = sphi 0, %s195
      %s212 = sphi 0, %s196
    $region4: #{tpu_custom_call.1} parent=1 // loop_header_branch
      %23 = sbr.rel (%p21) target = $region8
    $region5: #{tpu_custom_call.1} parent=1 // loop_body
      %s25 = ssub.s32 %s20, 1
      %s26 = ssub.s32 %s20, 2
      %s27 = sadd.s32 %s20, 1
      %s28 = ssub.s32 %s20, %s27
      %p29 = scmp.eq.s32.totalorder %s28, 0
      %s31 = sadd.s32 %s30, 1
      %s32 = scalar_select %p29, %s30, %s31
      %p35 = pneg %p29
      %p36 = scmp.eq.s32.totalorder %s20, 1
      %p37 = por %p35, %p36
      %p38 = scmp.ne.s32.totalorder %s30, %s33
      %p39 = scmp.eq.s32.totalorder %s20, 0
      %p40 = por %p38, %p39
      %p41 = scmp.ne.s32.totalorder %s30, %s33
      %p42 = scmp.eq.s32.totalorder %s25, 1
      %p43 = por %p41, %p42
      %p44 = scmp.ne.s32.totalorder %s33, %s34
      %p45 = scmp.eq.s32.totalorder %s25, 0
      %p46 = por %p44, %p45
      %p47 = scmp.ne.s32.totalorder %s33, %s34
      %p48 = scmp.eq.s32.totalorder %s26, 1
      %p49 = por %p47, %p48
      %p51 = scmp.ne.s32.totalorder %s34, %s50
      %p52 = scmp.eq.s32.totalorder %s26, 0
      %p53 = por %p51, %p52
      %s54 = ssub.s32 %s20, %s27
      %p55 = scmp.eq.s32.totalorder %s54, 0
      %s57 = sadd.s32 %s56, 1
      %s58 = scalar_select %p55, %s56, %s57
      %p61 = pneg %p55
      %p62 = scmp.eq.s32.totalorder %s20, 1
      %p63 = por %p61, %p62
      %p64 = scmp.ne.s32.totalorder %s56, %s59
      %p65 = scmp.eq.s32.totalorder %s20, 0
      %p66 = por %p64, %p65
      %p67 = scmp.ne.s32.totalorder %s56, %s59
      %p68 = scmp.eq.s32.totalorder %s25, 1
      %p69 = por %p67, %p68
      %p70 = scmp.ne.s32.totalorder %s59, %s60
      %p71 = scmp.eq.s32.totalorder %s25, 0
      %p72 = por %p70, %p71
      %p73 = scmp.ne.s32.totalorder %s59, %s60
      %p74 = scmp.eq.s32.totalorder %s26, 1
      %p75 = por %p73, %p74
      %p77 = scmp.ne.s32.totalorder %s60, %s76
      %p78 = scmp.eq.s32.totalorder %s26, 0
      %p79 = por %p77, %p78
      %s80 = ssub.s32 %s20, %s27
      %p81 = scmp.eq.s32.totalorder %s80, 0
      %s83 = sadd.s32 %s82, 1
      %s84 = scalar_select %p81, %s82, %s83
      %p87 = pneg %p81
      %p88 = scmp.eq.s32.totalorder %s20, 1
      %p89 = por %p87, %p88
      %p90 = scmp.ne.s32.totalorder %s82, %s85
      %p91 = scmp.eq.s32.totalorder %s20, 0
      %p92 = por %p90, %p91
      %p93 = scmp.ne.s32.totalorder %s82, %s85
      %p94 = scmp.eq.s32.totalorder %s25, 1
      %p95 = por %p93, %p94
      %p96 = scmp.ne.s32.totalorder %s85, %s86
      %p97 = scmp.eq.s32.totalorder %s25, 0
      %p98 = por %p96, %p97
      %p99 = scmp.ne.s32.totalorder %s85, %s86
      %p100 = scmp.eq.s32.totalorder %s26, 1
      %p101 = por %p99, %p100
      %p103 = scmp.ne.s32.totalorder %s86, %s102
      %p104 = scmp.eq.s32.totalorder %s26, 0
      %p105 = por %p103, %p104
      %s107 = sadd.s32 %s106, 1
      %p110 = scmp.eq.s32.totalorder %s20, 1
      %p111 = scmp.ne.s32.totalorder %s106, %s108
      %p112 = scmp.eq.s32.totalorder %s20, 0
      %p113 = por %p111, %p112
      %p114 = scmp.ne.s32.totalorder %s106, %s108
      %p115 = scmp.eq.s32.totalorder %s25, 1
      %p116 = por %p114, %p115
      %p117 = scmp.ne.s32.totalorder %s108, %s109
      %p118 = scmp.eq.s32.totalorder %s25, 0
      %p119 = por %p117, %p118
      %p120 = scmp.ne.s32.totalorder %s108, %s109
      %p121 = scmp.eq.s32.totalorder %s26, 1
      %p122 = por %p120, %p121
      %p124 = scmp.ne.s32.totalorder %s109, %s123
      %p125 = scmp.eq.s32.totalorder %s26, 0
      %p126 = por %p124, %p125
      %s128 = sadd.s32 %s127, 1
      %p131 = scmp.eq.s32.totalorder %s20, 1
      %p132 = scmp.ne.s32.totalorder %s127, %s129
      %p133 = scmp.eq.s32.totalorder %s20, 0
      %p134 = por %p132, %p133
      %p135 = scmp.ne.s32.totalorder %s127, %s129
      %p136 = scmp.eq.s32.totalorder %s25, 1
      %p137 = por %p135, %p136
      %p138 = scmp.ne.s32.totalorder %s129, %s130
      %p139 = scmp.eq.s32.totalorder %s25, 0
      %p140 = por %p138, %p139
      %p141 = scmp.ne.s32.totalorder %s129, %s130
      %p142 = scmp.eq.s32.totalorder %s26, 1
      %p143 = por %p141, %p142
      %p145 = scmp.ne.s32.totalorder %s130, %s144
      %p146 = scmp.eq.s32.totalorder %s26, 0
      %p147 = por %p145, %p146
      %s149 = sadd.s32 %s148, 1
      %p152 = scmp.eq.s32.totalorder %s20, 1
      %p153 = scmp.ne.s32.totalorder %s148, %s150
      %p154 = scmp.eq.s32.totalorder %s20, 0
      %p155 = por %p153, %p154
      %p156 = scmp.ne.s32.totalorder %s148, %s150
      %p157 = scmp.eq.s32.totalorder %s25, 1
      %p158 = por %p156, %p157
      %p159 = scmp.ne.s32.totalorder %s150, %s151
      %p160 = scmp.eq.s32.totalorder %s25, 0
      %p161 = por %p159, %p160
      %p162 = scmp.ne.s32.totalorder %s150, %s151
      %p163 = scmp.eq.s32.totalorder %s26, 1
      %p164 = por %p162, %p163
      %p166 = scmp.ne.s32.totalorder %s151, %s165
      %p167 = scmp.eq.s32.totalorder %s26, 0
      %p168 = por %p166, %p167
      %s170 = sadd.s32 %s169, 1
      %p173 = scmp.eq.s32.totalorder %s20, 1
      %p174 = scmp.ne.s32.totalorder %s169, %s171
      %p175 = scmp.eq.s32.totalorder %s20, 0
      %p176 = por %p174, %p175
      %p177 = scmp.ne.s32.totalorder %s169, %s171
      %p178 = scmp.eq.s32.totalorder %s25, 1
      %p179 = por %p177, %p178
      %p180 = scmp.ne.s32.totalorder %s171, %s172
      %p181 = scmp.eq.s32.totalorder %s25, 0
      %p182 = por %p180, %p181
      %p183 = scmp.ne.s32.totalorder %s171, %s172
      %p184 = scmp.eq.s32.totalorder %s26, 1
      %p185 = por %p183, %p184
      %p187 = scmp.ne.s32.totalorder %s172, %s186
      %p188 = scmp.eq.s32.totalorder %s26, 0
      %p189 = por %p187, %p188
      %s190 = ssub.s32 %s20, %s27
      %p191 = scmp.eq.s32.totalorder %s190, 0
      %s193 = sadd.s32 %s192, 1
      %s194 = scalar_select %p191, %s192, %s193
      %p197 = pneg %p191
      %p198 = scmp.eq.s32.totalorder %s20, 1
      %p199 = por %p197, %p198
      %p200 = scmp.ne.s32.totalorder %s192, %s195
      %p201 = scmp.eq.s32.totalorder %s20, 0
      %p202 = por %p200, %p201
      %p203 = scmp.ne.s32.totalorder %s192, %s195
      %p204 = scmp.eq.s32.totalorder %s25, 1
      %p205 = por %p203, %p204
      %p206 = scmp.ne.s32.totalorder %s195, %s196
      %p207 = scmp.eq.s32.totalorder %s25, 0
      %p208 = por %p206, %p207
      %p209 = scmp.ne.s32.totalorder %s195, %s196
      %p210 = scmp.eq.s32.totalorder %s26, 1
      %p211 = por %p209, %p210
      %p213 = scmp.ne.s32.totalorder %s196, %s212
      %p214 = scmp.eq.s32.totalorder %s26, 0
      %p215 = por %p213, %p214
      %p216 = scmp.le.s32.totalorder 1, %s20
      %p217 = scmp.lt.s32.totalorder %s20, 3
      %p218 = pnand %p216, %p217
      %p219 = pneg %p218
      // Predicated region
      $region9: #{tpu_custom_call.1} parent=5 // pred_check
        _
      $region10: #{tpu_custom_call.1} parent=5 // pred_check_branch
        %221 = sbr.rel (%p218) target = $region12
      $region11: #{tpu_custom_call.1} parent=5 // pred_region
        %s222 = ssub.s32 %s20, 1
        // Predicated region
        $region13: #{tpu_custom_call.1} parent=11 // pred_check
          %p223 = pneg %p119
        $region14: #{tpu_custom_call.1} parent=11 // pred_check_branch
          %225 = sbr.rel (%p223) target = $region16
        $region15: #{tpu_custom_call.1} parent=11 // pred_region
          _
        $region16: #{tpu_custom_call.1} parent=11 // pred_fallthru
          _
        // Predicated region
        $region17: #{tpu_custom_call.1} parent=11 // pred_check
          %p226 = pneg %p140
        $region18: #{tpu_custom_call.1} parent=11 // pred_check_branch
          %228 = sbr.rel (%p226) target = $region20
        $region19: #{tpu_custom_call.1} parent=11 // pred_region
          _
        $region20: #{tpu_custom_call.1} parent=11 // pred_fallthru
          _
        // Predicated region
        $region21: #{tpu_custom_call.1} parent=11 // pred_check
          %p229 = pneg %p161
        $region22: #{tpu_custom_call.1} parent=11 // pred_check_branch
          %231 = sbr.rel (%p229) target = $region24
        $region23: #{tpu_custom_call.1} parent=11 // pred_region
          %s233 = ssub.s32 1024, 1024
          %234 = vsyncadd [#allocation6], %s233
          %s235 = sshll.u32 [#allocation5], 4
          %s236 = int_to_ptr.vmem [resolvable:$true] %s235
          %241 = dma.hbm_to_vmem [thread:$0]  %s5, 1024, %s236, [#allocation6], 64, 64, 4
        $region24: #{tpu_custom_call.1} parent=11 // pred_fallthru
          _
        // Predicated region
        $region25: #{tpu_custom_call.1} parent=11 // pred_check
          %p242 = pneg %p182
        $region26: #{tpu_custom_call.1} parent=11 // pred_check_branch
          %244 = sbr.rel (%p242) target = $region28
        $region27: #{tpu_custom_call.1} parent=11 // pred_region
          _
        $region28: #{tpu_custom_call.1} parent=11 // pred_fallthru
          _
      $region12: #{tpu_custom_call.1} parent=5 // pred_fallthru
        _
      %p245 = scmp.lt.s32.totalorder %s20, 2
      // Predicated region
      $region29: #{tpu_custom_call.1} parent=5 // pred_check
        %p246 = pneg %p245
      $region30: #{tpu_custom_call.1} parent=5 // pred_check_branch
        %248 = sbr.rel (%p246) target = $region32
      $region31: #{tpu_custom_call.1} parent=5 // pred_region
        // Predicated region
        $region33: #{tpu_custom_call.1} parent=31 // pred_check
          %p249 = pneg %p40
        $region34: #{tpu_custom_call.1} parent=31 // pred_check_branch
          %251 = sbr.rel (%p249) target = $region36
        $region35: #{tpu_custom_call.1} parent=31 // pred_region
          %p252 = scmp.lt.s32.totalorder %s20, 1
          %s253 = scalar_select %p252, %s20, 1
          %s254 = smul.addr %s253, 16
          %s255 = smul.addr %s254, 4
          %s256 = scalar_lea.vmem %s0, %s255
        $region36: #{tpu_custom_call.1} parent=31 // pred_fallthru
          _
        // Predicated region
        $region37: #{tpu_custom_call.1} parent=31 // pred_check
          %p257 = pneg %p66
        $region38: #{tpu_custom_call.1} parent=31 // pred_check_branch
          %259 = sbr.rel (%p257) target = $region40
        $region39: #{tpu_custom_call.1} parent=31 // pred_region
          %p260 = scmp.lt.s32.totalorder %s20, 1
          %s261 = scalar_select %p260, %s20, 1
          %s262 = smul.addr %s261, 16
          %s263 = smul.addr %s262, 4
          %s264 = scalar_lea.vmem %s1, %s263
        $region40: #{tpu_custom_call.1} parent=31 // pred_fallthru
          _
        // Predicated region
        $region41: #{tpu_custom_call.1} parent=31 // pred_check
          %p265 = pneg %p92
        $region42: #{tpu_custom_call.1} parent=31 // pred_check_branch
          %267 = sbr.rel (%p265) target = $region44
        $region43: #{tpu_custom_call.1} parent=31 // pred_region
          %s268 = sand.u32 %s82, 1
          %s269 = scalar_lea.sflag [#allocation3], %s268
          %s270 = sand.u32 %s82, 1
          %s271 = smul.addr %s270, 16
          %s272 = scalar_lea.vmem [#allocation2], %s271
          %s274 = ssub.s32 256, 256
          %275 = vsyncadd %s269, %s274
          %s276 = smul.addr %s20, 2
          %s277 = smul.addr %s276, 128
          %s278 = scalar_lea.hbm %s2, %s277
          %s279 = sshll.u32 %s272, 4
          %s280 = int_to_ptr.vmem [resolvable:$true] %s279
          %285 = dma.hbm_to_vmem [thread:$0]  %s278, 256, %s280, %s269, 128, 128, 8
        $region44: #{tpu_custom_call.1} parent=31 // pred_fallthru
          _
      $region32: #{tpu_custom_call.1} parent=5 // pred_fallthru
        _
      %p286 = scmp.le.s32.totalorder 1, %s20
      %p287 = scmp.lt.s32.totalorder %s20, 3
      %p288 = pnand %p286, %p287
      %p289 = pneg %p288
      // Predicated region
      $region45: #{tpu_custom_call.1} parent=5 // pred_check
        _
      $region46: #{tpu_custom_call.1} parent=5 // pred_check_branch
        %291 = sbr.rel (%p288) target = $region48
      $region47: #{tpu_custom_call.1} parent=5 // pred_region
        %s292 = ssub.s32 %s20, 1
        %s293 = sand.u32 %s85, 1
        %s294 = scalar_lea.sflag [#allocation3], %s293
        %s295 = sand.u32 %s85, 1
        %s296 = smul.addr %s295, 16
        %s297 = scalar_lea.vmem [#allocation2], %s296
        // Predicated region
        $region49: #{tpu_custom_call.1} parent=47 // pred_check
          %p298 = pneg %p98
        $region50: #{tpu_custom_call.1} parent=47 // pred_check_branch
          %300 = sbr.rel (%p298) target = $region52
        $region51: #{tpu_custom_call.1} parent=47 // pred_region
          %301 = dma.done %s294, 256
        $region52: #{tpu_custom_call.1} parent=47 // pred_fallthru
          _
        // Predicated region
        $region53: #{tpu_custom_call.1} parent=47 // pred_check
          %p302 = pneg %p161
        $region54: #{tpu_custom_call.1} parent=47 // pred_check_branch
          %304 = sbr.rel (%p302) target = $region56
        $region55: #{tpu_custom_call.1} parent=47 // pred_region
          %305 = dma.done [#allocation6], 1024
        $region56: #{tpu_custom_call.1} parent=47 // pred_fallthru
          _
        %p306 = scmp.lt.s32.totalorder %s25, 1
        %s307 = scalar_select %p306, %s25, 1
        %s308 = smul.addr %s307, 16
        %s309 = smul.addr %s308, 4
        %s310 = scalar_lea.vmem %s0, %s309
        %p311 = pneg %p46
        %p312 = pneg %p43
        %p313 = scmp.lt.s32.totalorder %s25, 1
        %s314 = scalar_select %p313, %s25, 1
        %s315 = smul.addr %s314, 16
        %s316 = smul.addr %s315, 4
        %s317 = scalar_lea.vmem %s1, %s316
        %p318 = pneg %p72
        %p319 = pneg %p69
        %s320 = sand.u32 %s85, 1
        %s321 = scalar_lea.sflag [#allocation3], %s320
        %s322 = sand.u32 %s85, 1
        %s323 = smul.addr %s322, 16
        %s324 = scalar_lea.vmem [#allocation2], %s323
        %p325 = pneg %p98
        %p326 = pneg %p95
        %p327 = pneg %p119
        %p328 = pneg %p116
        %p329 = pneg %p140
        %p330 = pneg %p137
        %p331 = pneg %p161
        %p332 = pneg %p158
        %p333 = pneg %p182
        %p334 = pneg %p179
        %p335 = pneg %p208
        %p336 = pneg %p205
        %s337 = sand.u32 %s195, 1
        %s338 = scalar_lea.sflag [#allocation4], %s337
        %s339 = sand.u32 %s195, 1
        %s340 = smul.addr %s339, 16
        %s341 = scalar_lea.vmem [#allocation7], %s340
        %p342 = scmp.lt.s32.totalorder %s25, 1
        %s343 = scalar_select %p342, %s25, 1
        %s344 = smul.addr %s343, 16
        %s345 = smul.addr %s344, 4
        %s346 = scalar_lea.vmem %s0, %s345
        %p347 = scmp.lt.s32.totalorder %s25, 1
        %s348 = scalar_select %p347, %s25, 1
        %s349 = smul.addr %s348, 16
        %s350 = smul.addr %s349, 4
        %s351 = scalar_lea.vmem %s1, %s350
        %v353 = vld [vmem:[%s346] sm:$0xf]
        %v354 = vld [vmem:[%s346 + $0x4] sm:$0xf]
        %v355 = vld [vmem:[%s346 + $0x8] sm:$0xf]
        %v356 = vld [vmem:[%s346 + $0xc] sm:$0xf]
        %v357 = vld [vmem:[%s346 + $0x10] sm:$0xf]
        %v358 = vld [vmem:[%s346 + $0x14] sm:$0xf]
        %v359 = vld [vmem:[%s346 + $0x18] sm:$0xf]
        %v360 = vld [vmem:[%s346 + $0x1c] sm:$0xf]
        %v361 = vld [vmem:[%s346 + $0x20] sm:$0xf]
        %v362 = vld [vmem:[%s346 + $0x24] sm:$0xf]
        %v363 = vld [vmem:[%s346 + $0x28] sm:$0xf]
        %v364 = vld [vmem:[%s346 + $0x2c] sm:$0xf]
        %v365 = vld [vmem:[%s346 + $0x30] sm:$0xf]
        %v366 = vld [vmem:[%s346 + $0x34] sm:$0xf]
        %v367 = vld [vmem:[%s346 + $0x38] sm:$0xf]
        %v368 = vld [vmem:[%s346 + $0x3c] sm:$0xf]
        %v369 = vld [vmem:[%s351] sm:$0xf]
        %v370 = vld [vmem:[%s351 + $0x4] sm:$0xf]
        %v371 = vld [vmem:[%s351 + $0x8] sm:$0xf]
        %v372 = vld [vmem:[%s351 + $0xc] sm:$0xf]
        %v373 = vld [vmem:[%s351 + $0x10] sm:$0xf]
        %v374 = vld [vmem:[%s351 + $0x14] sm:$0xf]
        %v375 = vld [vmem:[%s351 + $0x18] sm:$0xf]
        %v376 = vld [vmem:[%s351 + $0x1c] sm:$0xf]
        %v377 = vld [vmem:[%s351 + $0x20] sm:$0xf]
        %v378 = vld [vmem:[%s351 + $0x24] sm:$0xf]
        %v379 = vld [vmem:[%s351 + $0x28] sm:$0xf]
        %v380 = vld [vmem:[%s351 + $0x2c] sm:$0xf]
        %v381 = vld [vmem:[%s351 + $0x30] sm:$0xf]
        %v382 = vld [vmem:[%s351 + $0x34] sm:$0xf]
        %v383 = vld [vmem:[%s351 + $0x38] sm:$0xf]
        %v384 = vld [vmem:[%s351 + $0x3c] sm:$0xf]
        %v401 = vunpack.c.l.b16 %v353
        %v402 = vunpack.c.l.b16 %v354
        %v403 = vunpack.c.l.b16 %v355
        %v404 = vunpack.c.l.b16 %v356
        %v405 = vunpack.c.l.b16 %v357
        %v406 = vunpack.c.l.b16 %v358
        %v407 = vunpack.c.l.b16 %v359
        %v408 = vunpack.c.l.b16 %v360
        %v409 = vunpack.c.l.b16 %v361
        %v410 = vunpack.c.l.b16 %v362
        %v411 = vunpack.c.l.b16 %v363
        %v412 = vunpack.c.l.b16 %v364
        %v413 = vunpack.c.l.b16 %v365
        %v414 = vunpack.c.l.b16 %v366
        %v415 = vunpack.c.l.b16 %v367
        %v416 = vunpack.c.l.b16 %v368
        %v417 = vpack.c.b16 %v402, %v401
        %v418 = vpack.c.b16 %v404, %v403
        %v419 = vpack.c.b16 %v406, %v405
        %v420 = vpack.c.b16 %v408, %v407
        %v421 = vpack.c.b16 %v410, %v409
        %v422 = vpack.c.b16 %v412, %v411
        %v423 = vpack.c.b16 %v414, %v413
        %v424 = vpack.c.b16 %v416, %v415
        %v449 = vunpack.c.l.b16 %v369
        %v450 = vunpack.c.l.b16 %v370
        %v451 = vunpack.c.l.b16 %v371
        %v452 = vunpack.c.l.b16 %v372
        %v453 = vunpack.c.l.b16 %v373
        %v454 = vunpack.c.l.b16 %v374
        %v455 = vunpack.c.l.b16 %v375
        %v456 = vunpack.c.l.b16 %v376
        %v457 = vunpack.c.l.b16 %v377
        %v458 = vunpack.c.l.b16 %v378
        %v459 = vunpack.c.l.b16 %v379
        %v460 = vunpack.c.l.b16 %v380
        %v461 = vunpack.c.l.b16 %v381
        %v462 = vunpack.c.l.b16 %v382
        %v463 = vunpack.c.l.b16 %v383
        %v464 = vunpack.c.l.b16 %v384
        %v465 = vpack.c.b16 %v450, %v449
        %v466 = vpack.c.b16 %v452, %v451
        %v467 = vpack.c.b16 %v454, %v453
        %v468 = vpack.c.b16 %v456, %v455
        %v469 = vpack.c.b16 %v458, %v457
        %v470 = vpack.c.b16 %v460, %v459
        %v471 = vpack.c.b16 %v462, %v461
        %v472 = vpack.c.b16 %v464, %v463
        %481 = vmatprep.subr.bf16.mxu0 0
        %482 = vmatpush1.bf16.msra.mxu0 %v465
        %483 = vmatprep.subr.bf16.mxu0 0
        %484 = vmatpush1.bf16.msra.mxu0 %v466
        %485 = vmatprep.subr.bf16.mxu0 0
        %486 = vmatpush1.bf16.msra.mxu0 %v467
        %487 = vmatprep.subr.bf16.mxu0 0
        %488 = vmatpush1.bf16.msra.mxu0 %v468
        %489 = vmatprep.subr.bf16.mxu0 0
        %490 = vmatpush1.bf16.msra.mxu0 %v469
        %491 = vmatprep.subr.bf16.mxu0 0
        %492 = vmatpush1.bf16.msra.mxu0 %v470
        %493 = vmatprep.subr.bf16.mxu0 0
        %494 = vmatpush1.bf16.msra.mxu0 %v471
        %495 = vmatprep.subr.bf16.mxu0 0
        %496 = vmatpush1.bf16.msra.mxu0 %v472
        %497 = vmatprep.subr.bf16.mxu0 0
        %498 = vmatpush1.bf16.msra.mxu0 0
        %499 = vmatprep.subr.bf16.mxu0 0
        %500 = vmatpush1.bf16.msra.mxu0 0
        %501 = vmatprep.subr.bf16.mxu0 0
        %502 = vmatpush1.bf16.msra.mxu0 0
        %503 = vmatprep.subr.bf16.mxu0 0
        %504 = vmatpush1.bf16.msra.mxu0 0
        %505 = vmatprep.subr.bf16.mxu0 0
        %506 = vmatpush1.bf16.msra.mxu0 0
        %507 = vmatprep.subr.bf16.mxu0 0
        %508 = vmatpush1.bf16.msra.mxu0 0
        %509 = vmatprep.subr.bf16.mxu0 0
        %510 = vmatpush1.bf16.msra.mxu0 0
        %511 = vmatprep.subr.bf16.mxu0 0
        %512 = vmatpush1.bf16.msra.mxu0 0
        %513 = vmatprep.mubr.bf16.mxu0 0
        %514 = vmatmul.mubr.bf16.gmra.mrb[0].mxu0 %v417
        %v515 = vpop.f32.mrb[0].mxu0
        %v516 = vadd.f32 0.0, %v515
        %v517 = vpop.f32.mrb[0].mxu0
        %v518 = vpop.f32.mrb[0].mxu0
        %v519 = vadd.f32 0.0, %v518
        %v520 = vpop.f32.mrb[0].mxu0
        %521 = vmatprep.mubr.bf16.mxu0 0
        %522 = vmatmul.mubr.bf16.gmra.mrb[0].mxu0 %v418
        %v523 = vpop.f32.mrb[0].mxu0
        %v524 = vadd.f32 0.0, %v523
        %v525 = vpop.f32.mrb[0].mxu0
        %v526 = vpop.f32.mrb[0].mxu0
        %v527 = vadd.f32 0.0, %v526
        %v528 = vpop.f32.mrb[0].mxu0
        %529 = vmatprep.mubr.bf16.mxu0 0
        %530 = vmatmul.mubr.bf16.gmra.mrb[0].mxu0 %v419
        %v531 = vpop.f32.mrb[0].mxu0
        %v532 = vadd.f32 0.0, %v531
        %v533 = vpop.f32.mrb[0].mxu0
        %v534 = vpop.f32.mrb[0].mxu0
        %v535 = vadd.f32 0.0, %v534
        %v536 = vpop.f32.mrb[0].mxu0
        %537 = vmatprep.mubr.bf16.mxu0 0
        %538 = vmatmul.mubr.bf16.gmra.mrb[0].mxu0 %v420
        %v539 = vpop.f32.mrb[0].mxu0
        %v540 = vadd.f32 0.0, %v539
        %v541 = vpop.f32.mrb[0].mxu0
        %v542 = vpop.f32.mrb[0].mxu0
        %v543 = vadd.f32 0.0, %v542
        %v544 = vpop.f32.mrb[0].mxu0
        %545 = vmatprep.mubr.bf16.mxu0 0
        %546 = vmatmul.mubr.bf16.gmra.mrb[0].mxu0 %v421
        %v547 = vpop.f32.mrb[0].mxu0
        %v548 = vadd.f32 0.0, %v547
        %v549 = vpop.f32.mrb[0].mxu0
        %v550 = vpop.f32.mrb[0].mxu0
        %v551 = vadd.f32 0.0, %v550
        %v552 = vpop.f32.mrb[0].mxu0
        %553 = vmatprep.mubr.bf16.mxu0 0
        %554 = vmatmul.mubr.bf16.gmra.mrb[0].mxu0 %v422
        %v555 = vpop.f32.mrb[0].mxu0
        %v556 = vadd.f32 0.0, %v555
        %v557 = vpop.f32.mrb[0].mxu0
        %v558 = vpop.f32.mrb[0].mxu0
        %v559 = vadd.f32 0.0, %v558
        %v560 = vpop.f32.mrb[0].mxu0
        %561 = vmatprep.mubr.bf16.mxu0 0
        %562 = vmatmul.mubr.bf16.gmra.mrb[0].mxu0 %v423
        %v563 = vpop.f32.mrb[0].mxu0
        %v564 = vadd.f32 0.0, %v563
        %v565 = vpop.f32.mrb[0].mxu0
        %v566 = vpop.f32.mrb[0].mxu0
        %v567 = vadd.f32 0.0, %v566
        %v568 = vpop.f32.mrb[0].mxu0
        %569 = vmatprep.mubr.bf16.mxu0 0
        %570 = vmatmul.mubr.bf16.gmra.mrb[0].mxu0 %v424
        %v571 = vpop.f32.mrb[0].mxu0
        %v572 = vadd.f32 0.0, %v571
        %v573 = vpop.f32.mrb[0].mxu0
        %v574 = vpop.f32.mrb[0].mxu0
        %v575 = vadd.f32 0.0, %v574
        %v576 = vpop.f32.mrb[0].mxu0
        %577 = vdwg.mxu0
        %v578 = vpack.c.bf16 %v519, %v516
        %v579 = vpack.c.bf16 %v527, %v524
        %v580 = vpack.c.bf16 %v535, %v532
        %v581 = vpack.c.bf16 %v543, %v540
        %v582 = vpack.c.bf16 %v551, %v548
        %v583 = vpack.c.bf16 %v559, %v556
        %v584 = vpack.c.bf16 %v567, %v564
        %v585 = vpack.c.bf16 %v575, %v572
        %v586 = vld [vmem:[%s3] sm:$0xf]
        %v587 = vld [vmem:[%s4] sm:$0x1]
        %v589 = vlaneseq
        %v590 = vshrl.u32 %v589, 7
        %v591 = vsub.s32 0, %v590
        %v592 = vrot.slane %v587, %v591
        %vm594 = vcmask 64512
        %v596 = vsel %vm594, %v578, 0
        %v599 = vsel %vm594, %v579, 0
        %v602 = vsel %vm594, %v580, 0
        %v605 = vsel %vm594, %v581, 0
        %v608 = vsel %vm594, %v582, 0
        %v611 = vsel %vm594, %v583, 0
        %v614 = vsel %vm594, %v584, 0
        %v617 = vsel %vm594, %v585, 0
        %vm619 = vcmask 1043456
        %v621 = vsel %vm619, %v586, 0
        %623 = vmatprep.subr.bf16.mxu0 0
        %624 = vmatpush1.bf16.msra.mxu0 %v621
        %625 = vmatprep.subr.bf16.mxu0 0
        %626 = vmatpush1.bf16.msra.mxu0 0
        %627 = vmatprep.subr.bf16.mxu0 0
        %628 = vmatpush1.bf16.msra.mxu0 0
        %629 = vmatprep.subr.bf16.mxu0 0
        %630 = vmatpush1.bf16.msra.mxu0 0
        %631 = vmatprep.subr.bf16.mxu0 0
        %632 = vmatpush1.bf16.msra.mxu0 0
        %633 = vmatprep.subr.bf16.mxu0 0
        %634 = vmatpush1.bf16.msra.mxu0 0
        %635 = vmatprep.subr.bf16.mxu0 0
        %636 = vmatpush1.bf16.msra.mxu0 0
        %637 = vmatprep.subr.bf16.mxu0 0
        %638 = vmatpush1.bf16.msra.mxu0 0
        %639 = vmatprep.subr.bf16.mxu0 0
        %640 = vmatpush1.bf16.msra.mxu0 0
        %641 = vmatprep.subr.bf16.mxu0 0
        %642 = vmatpush1.bf16.msra.mxu0 0
        %643 = vmatprep.subr.bf16.mxu0 0
        %644 = vmatpush1.bf16.msra.mxu0 0
        %645 = vmatprep.subr.bf16.mxu0 0
        %646 = vmatpush1.bf16.msra.mxu0 0
        %647 = vmatprep.subr.bf16.mxu0 0
        %648 = vmatpush1.bf16.msra.mxu0 0
        %649 = vmatprep.subr.bf16.mxu0 0
        %650 = vmatpush1.bf16.msra.mxu0 0
        %651 = vmatprep.subr.bf16.mxu0 0
        %652 = vmatpush1.bf16.msra.mxu0 0
        %653 = vmatprep.subr.bf16.mxu0 0
        %654 = vmatpush1.bf16.msra.mxu0 0
        %655 = vmatprep.mubr.bf16.mxu0 0
        %656 = vmatmul.mubr.bf16.gmra.mrb[0].mxu0 %v596
        %v657 = vpop.f32.mrb[0].mxu0
        %v658 = vadd.f32 %v592, %v657
        %v659 = vpop.f32.mrb[0].mxu0
        %v660 = vpop.f32.mrb[0].mxu0
        %v661 = vadd.f32 %v592, %v660
        %v662 = vpop.f32.mrb[0].mxu0
        %663 = vmatprep.mubr.bf16.mxu0 0
        %664 = vmatmul.mubr.bf16.gmra.mrb[0].mxu0 %v599
        %v665 = vpop.f32.mrb[0].mxu0
        %v666 = vadd.f32 %v592, %v665
        %v667 = vpop.f32.mrb[0].mxu0
        %v668 = vpop.f32.mrb[0].mxu0
        %v669 = vadd.f32 %v592, %v668
        %v670 = vpop.f32.mrb[0].mxu0
        %671 = vmatprep.mubr.bf16.mxu0 0
        %672 = vmatmul.mubr.bf16.gmra.mrb[0].mxu0 %v602
        %v673 = vpop.f32.mrb[0].mxu0
        %v674 = vadd.f32 %v592, %v673
        %v675 = vpop.f32.mrb[0].mxu0
        %v676 = vpop.f32.mrb[0].mxu0
        %v677 = vadd.f32 %v592, %v676
        %v678 = vpop.f32.mrb[0].mxu0
        %679 = vmatprep.mubr.bf16.mxu0 0
        %680 = vmatmul.mubr.bf16.gmra.mrb[0].mxu0 %v605
        %v681 = vpop.f32.mrb[0].mxu0
        %v682 = vadd.f32 %v592, %v681
        %v683 = vpop.f32.mrb[0].mxu0
        %v684 = vpop.f32.mrb[0].mxu0
        %v685 = vadd.f32 %v592, %v684
        %v686 = vpop.f32.mrb[0].mxu0
        %687 = vmatprep.mubr.bf16.mxu0 0
        %688 = vmatmul.mubr.bf16.gmra.mrb[0].mxu0 %v608
        %v689 = vpop.f32.mrb[0].mxu0
        %v690 = vadd.f32 %v592, %v689
        %v691 = vpop.f32.mrb[0].mxu0
        %v692 = vpop.f32.mrb[0].mxu0
        %v693 = vadd.f32 %v592, %v692
        %v694 = vpop.f32.mrb[0].mxu0
        %695 = vmatprep.mubr.bf16.mxu0 0
        %696 = vmatmul.mubr.bf16.gmra.mrb[0].mxu0 %v611
        %v697 = vpop.f32.mrb[0].mxu0
        %v698 = vadd.f32 %v592, %v697
        %v699 = vpop.f32.mrb[0].mxu0
        %v700 = vpop.f32.mrb[0].mxu0
        %v701 = vadd.f32 %v592, %v700
        %v702 = vpop.f32.mrb[0].mxu0
        %703 = vmatprep.mubr.bf16.mxu0 0
        %704 = vmatmul.mubr.bf16.gmra.mrb[0].mxu0 %v614
        %v705 = vpop.f32.mrb[0].mxu0
        %v706 = vadd.f32 %v592, %v705
        %v707 = vpop.f32.mrb[0].mxu0
        %v708 = vpop.f32.mrb[0].mxu0
        %v709 = vadd.f32 %v592, %v708
        %v710 = vpop.f32.mrb[0].mxu0
        %711 = vmatprep.mubr.bf16.mxu0 0
        %712 = vmatmul.mubr.bf16.gmra.mrb[0].mxu0 %v617
        %v713 = vpop.f32.mrb[0].mxu0
        %v714 = vadd.f32 %v592, %v713
        %v715 = vpop.f32.mrb[0].mxu0
        %v716 = vpop.f32.mrb[0].mxu0
        %v717 = vadd.f32 %v592, %v716
        %v718 = vpop.f32.mrb[0].mxu0
        %719 = vdwg.mxu0
        %v720 = vmax.f32 %v658, 0.0
        %v721 = vmax.f32 %v661, 0.0
        %v722 = vmax.f32 %v666, 0.0
        %v723 = vmax.f32 %v669, 0.0
        %v724 = vmax.f32 %v674, 0.0
        %v725 = vmax.f32 %v677, 0.0
        %v726 = vmax.f32 %v682, 0.0
        %v727 = vmax.f32 %v685, 0.0
        %v728 = vmax.f32 %v690, 0.0
        %v729 = vmax.f32 %v693, 0.0
        %v730 = vmax.f32 %v698, 0.0
        %v731 = vmax.f32 %v701, 0.0
        %v732 = vmax.f32 %v706, 0.0
        %v733 = vmax.f32 %v709, 0.0
        %v734 = vmax.f32 %v714, 0.0
        %v735 = vmax.f32 %v717, 0.0
        %v736 = vpack.c.bf16 %v721, %v720
        %v737 = vpack.c.bf16 %v723, %v722
        %v738 = vpack.c.bf16 %v725, %v724
        %v739 = vpack.c.bf16 %v727, %v726
        %v740 = vpack.c.bf16 %v729, %v728
        %v741 = vpack.c.bf16 %v731, %v730
        %v742 = vpack.c.bf16 %v733, %v732
        %v743 = vpack.c.bf16 %v735, %v734
        %v744 = vld [vmem:[#allocation5] sm:$0xf]
        %v745 = vld [vmem:[#allocation5 + $0x4] sm:$0xf]
        %v746 = vld [vmem:[#allocation5 + $0x8] sm:$0xf]
        %v747 = vld [vmem:[#allocation5 + $0xc] sm:$0xf]
        %v748 = vld [vmem:[#allocation5 + $0x10] sm:$0xf]
        %v749 = vld [vmem:[#allocation5 + $0x14] sm:$0xf]
        %v750 = vld [vmem:[#allocation5 + $0x18] sm:$0xf]
        %v751 = vld [vmem:[#allocation5 + $0x1c] sm:$0xf]
        %v752 = vld [vmem:[#allocation5 + $0x20] sm:$0xf]
        %v753 = vld [vmem:[#allocation5 + $0x24] sm:$0xf]
        %v754 = vld [vmem:[#allocation5 + $0x28] sm:$0xf]
        %v755 = vld [vmem:[#allocation5 + $0x2c] sm:$0xf]
        %v756 = vld [vmem:[#allocation5 + $0x30] sm:$0xf]
        %v757 = vld [vmem:[#allocation5 + $0x34] sm:$0xf]
        %v758 = vld [vmem:[#allocation5 + $0x38] sm:$0xf]
        %v759 = vld [vmem:[#allocation5 + $0x3c] sm:$0xf]
        %v776 = vunpack.c.l.b16 %v744
        %v777 = vunpack.c.l.b16 %v745
        %v778 = vunpack.c.l.b16 %v746
        %v779 = vunpack.c.l.b16 %v747
        %v780 = vunpack.c.l.b16 %v748
        %v781 = vunpack.c.l.b16 %v749
        %v782 = vunpack.c.l.b16 %v750
        %v783 = vunpack.c.l.b16 %v751
        %v784 = vunpack.c.l.b16 %v752
        %v785 = vunpack.c.l.b16 %v753
        %v786 = vunpack.c.l.b16 %v754
        %v787 = vunpack.c.l.b16 %v755
        %v788 = vunpack.c.l.b16 %v756
        %v789 = vunpack.c.l.b16 %v757
        %v790 = vunpack.c.l.b16 %v758
        %v791 = vunpack.c.l.b16 %v759
        %v792 = vpack.c.b16 %v777, %v776
        %v793 = vpack.c.b16 %v779, %v778
        %v794 = vpack.c.b16 %v781, %v780
        %v795 = vpack.c.b16 %v783, %v782
        %v796 = vpack.c.b16 %v785, %v784
        %v797 = vpack.c.b16 %v787, %v786
        %v798 = vpack.c.b16 %v789, %v788
        %v799 = vpack.c.b16 %v791, %v790
        %808 = vmatprep.subr.bf16.mxu0 0
        %809 = vmatpush1.bf16.msra.mxu0 %v792
        %810 = vmatprep.subr.bf16.mxu0 0
        %811 = vmatpush1.bf16.msra.mxu0 %v793
        %812 = vmatprep.subr.bf16.mxu0 0
        %813 = vmatpush1.bf16.msra.mxu0 %v794
        %814 = vmatprep.subr.bf16.mxu0 0
        %815 = vmatpush1.bf16.msra.mxu0 %v795
        %816 = vmatprep.subr.bf16.mxu0 0
        %817 = vmatpush1.bf16.msra.mxu0 %v796
        %818 = vmatprep.subr.bf16.mxu0 0
        %819 = vmatpush1.bf16.msra.mxu0 %v797
        %820 = vmatprep.subr.bf16.mxu0 0
        %821 = vmatpush1.bf16.msra.mxu0 %v798
        %822 = vmatprep.subr.bf16.mxu0 0
        %823 = vmatpush1.bf16.msra.mxu0 %v799
        %824 = vmatprep.subr.bf16.mxu0 0
        %825 = vmatpush1.bf16.msra.mxu0 0
        %826 = vmatprep.subr.bf16.mxu0 0
        %827 = vmatpush1.bf16.msra.mxu0 0
        %828 = vmatprep.subr.bf16.mxu0 0
        %829 = vmatpush1.bf16.msra.mxu0 0
        %830 = vmatprep.subr.bf16.mxu0 0
        %831 = vmatpush1.bf16.msra.mxu0 0
        %832 = vmatprep.subr.bf16.mxu0 0
        %833 = vmatpush1.bf16.msra.mxu0 0
        %834 = vmatprep.subr.bf16.mxu0 0
        %835 = vmatpush1.bf16.msra.mxu0 0
        %836 = vmatprep.subr.bf16.mxu0 0
        %837 = vmatpush1.bf16.msra.mxu0 0
        %838 = vmatprep.subr.bf16.mxu0 0
        %839 = vmatpush1.bf16.msra.mxu0 0
        %840 = vmatprep.mubr.bf16.mxu0 0
        %841 = vmatmul.mubr.bf16.gmra.mrb[0].mxu0 %v736
        %v842 = vpop.f32.mrb[0].mxu0
        %v843 = vadd.f32 0.0, %v842
        %v844 = vpop.f32.mrb[0].mxu0
        %v845 = vpop.f32.mrb[0].mxu0
        %v846 = vadd.f32 0.0, %v845
        %v847 = vpop.f32.mrb[0].mxu0
        %848 = vmatprep.mubr.bf16.mxu0 0
        %849 = vmatmul.mubr.bf16.gmra.mrb[0].mxu0 %v737
        %v850 = vpop.f32.mrb[0].mxu0
        %v851 = vadd.f32 0.0, %v850
        %v852 = vpop.f32.mrb[0].mxu0
        %v853 = vpop.f32.mrb[0].mxu0
        %v854 = vadd.f32 0.0, %v853
        %v855 = vpop.f32.mrb[0].mxu0
        %856 = vmatprep.mubr.bf16.mxu0 0
        %857 = vmatmul.mubr.bf16.gmra.mrb[0].mxu0 %v738
        %v858 = vpop.f32.mrb[0].mxu0
        %v859 = vadd.f32 0.0, %v858
        %v860 = vpop.f32.mrb[0].mxu0
        %v861 = vpop.f32.mrb[0].mxu0
        %v862 = vadd.f32 0.0, %v861
        %v863 = vpop.f32.mrb[0].mxu0
        %864 = vmatprep.mubr.bf16.mxu0 0
        %865 = vmatmul.mubr.bf16.gmra.mrb[0].mxu0 %v739
        %v866 = vpop.f32.mrb[0].mxu0
        %v867 = vadd.f32 0.0, %v866
        %v868 = vpop.f32.mrb[0].mxu0
        %v869 = vpop.f32.mrb[0].mxu0
        %v870 = vadd.f32 0.0, %v869
        %v871 = vpop.f32.mrb[0].mxu0
        %872 = vmatprep.mubr.bf16.mxu0 0
        %873 = vmatmul.mubr.bf16.gmra.mrb[0].mxu0 %v740
        %v874 = vpop.f32.mrb[0].mxu0
        %v875 = vadd.f32 0.0, %v874
        %v876 = vpop.f32.mrb[0].mxu0
        %v877 = vpop.f32.mrb[0].mxu0
        %v878 = vadd.f32 0.0, %v877
        %v879 = vpop.f32.mrb[0].mxu0
        %880 = vmatprep.mubr.bf16.mxu0 0
        %881 = vmatmul.mubr.bf16.gmra.mrb[0].mxu0 %v741
        %v882 = vpop.f32.mrb[0].mxu0
        %v883 = vadd.f32 0.0, %v882
        %v884 = vpop.f32.mrb[0].mxu0
        %v885 = vpop.f32.mrb[0].mxu0
        %v886 = vadd.f32 0.0, %v885
        %v887 = vpop.f32.mrb[0].mxu0
        %888 = vmatprep.mubr.bf16.mxu0 0
        %889 = vmatmul.mubr.bf16.gmra.mrb[0].mxu0 %v742
        %v890 = vpop.f32.mrb[0].mxu0
        %v891 = vadd.f32 0.0, %v890
        %v892 = vpop.f32.mrb[0].mxu0
        %v893 = vpop.f32.mrb[0].mxu0
        %v894 = vadd.f32 0.0, %v893
        %v895 = vpop.f32.mrb[0].mxu0
        %896 = vmatprep.mubr.bf16.mxu0 0
        %897 = vmatmul.mubr.bf16.gmra.mrb[0].mxu0 %v743
        %v898 = vpop.f32.mrb[0].mxu0
        %v899 = vadd.f32 0.0, %v898
        %v900 = vpop.f32.mrb[0].mxu0
        %v901 = vpop.f32.mrb[0].mxu0
        %v902 = vadd.f32 0.0, %v901
        %v903 = vpop.f32.mrb[0].mxu0
        %904 = vdwg.mxu0
        %v905 = vpack.c.bf16 %v846, %v843
        %v906 = vpack.c.bf16 %v854, %v851
        %v907 = vpack.c.bf16 %v862, %v859
        %v908 = vpack.c.bf16 %v870, %v867
        %v909 = vpack.c.bf16 %v878, %v875
        %v910 = vpack.c.bf16 %v886, %v883
        %v911 = vpack.c.bf16 %v894, %v891
        %v912 = vpack.c.bf16 %v902, %v899
        %v913 = vld [vmem:[%s6] sm:$0x1]
        %v915 = vlaneseq
        %v916 = vshrl.u32 %v915, 7
        %v917 = vsub.s32 0, %v916
        %v918 = vrot.slane %v913, %v917
        %920 = vmatprep.subr.bf16.mxu0 0
        %921 = vmatpush1.bf16.msra.mxu0 %v905
        %922 = vmatprep.subr.bf16.mxu0 0
        %923 = vmatpush1.bf16.msra.mxu0 %v906
        %924 = vmatprep.subr.bf16.mxu0 0
        %925 = vmatpush1.bf16.msra.mxu0 %v907
        %926 = vmatprep.subr.bf16.mxu0 0
        %927 = vmatpush1.bf16.msra.mxu0 %v908
        %928 = vmatprep.subr.bf16.mxu0 0
        %929 = vmatpush1.bf16.msra.mxu0 %v909
        %930 = vmatprep.subr.bf16.mxu0 0
        %931 = vmatpush1.bf16.msra.mxu0 %v910
        %932 = vmatprep.subr.bf16.mxu0 0
        %933 = vmatpush1.bf16.msra.mxu0 %v911
        %934 = vmatprep.subr.bf16.mxu0 0
        %935 = vmatpush1.bf16.msra.mxu0 %v912
        %936 = vmatprep.subr.bf16.mxu0 0
        %937 = vmatpush1.bf16.msra.mxu0 0
        %938 = vmatprep.subr.bf16.mxu0 0
        %939 = vmatpush1.bf16.msra.mxu0 0
        %940 = vmatprep.subr.bf16.mxu0 0
        %941 = vmatpush1.bf16.msra.mxu0 0
        %942 = vmatprep.subr.bf16.mxu0 0
        %943 = vmatpush1.bf16.msra.mxu0 0
        %944 = vmatprep.subr.bf16.mxu0 0
        %945 = vmatpush1.bf16.msra.mxu0 0
        %946 = vmatprep.subr.bf16.mxu0 0
        %947 = vmatpush1.bf16.msra.mxu0 0
        %948 = vmatprep.subr.bf16.mxu0 0
        %949 = vmatpush1.bf16.msra.mxu0 0
        %950 = vmatprep.subr.bf16.mxu0 0
        %951 = vmatpush1.bf16.msra.mxu0 0
        %952 = vmatprep.mubr.bf16.mxu0 0
        %953 = vmatmul.mubr.bf16.gmra.mrb[0].mxu0 %v417
        %v954 = vpop.f32.mrb[0].mxu0
        %v955 = vadd.f32 %v918, %v954
        %v956 = vpop.f32.mrb[0].mxu0
        %v957 = vpop.f32.mrb[0].mxu0
        %v958 = vadd.f32 %v918, %v957
        %v959 = vpop.f32.mrb[0].mxu0
        %960 = vmatprep.mubr.bf16.mxu0 0
        %961 = vmatmul.mubr.bf16.gmra.mrb[0].mxu0 %v418
        %v962 = vpop.f32.mrb[0].mxu0
        %v963 = vadd.f32 %v918, %v962
        %v964 = vpop.f32.mrb[0].mxu0
        %v965 = vpop.f32.mrb[0].mxu0
        %v966 = vadd.f32 %v918, %v965
        %v967 = vpop.f32.mrb[0].mxu0
        %968 = vmatprep.mubr.bf16.mxu0 0
        %969 = vmatmul.mubr.bf16.gmra.mrb[0].mxu0 %v419
        %v970 = vpop.f32.mrb[0].mxu0
        %v971 = vadd.f32 %v918, %v970
        %v972 = vpop.f32.mrb[0].mxu0
        %v973 = vpop.f32.mrb[0].mxu0
        %v974 = vadd.f32 %v918, %v973
        %v975 = vpop.f32.mrb[0].mxu0
        %976 = vmatprep.mubr.bf16.mxu0 0
        %977 = vmatmul.mubr.bf16.gmra.mrb[0].mxu0 %v420
        %v978 = vpop.f32.mrb[0].mxu0
        %v979 = vadd.f32 %v918, %v978
        %v980 = vpop.f32.mrb[0].mxu0
        %v981 = vpop.f32.mrb[0].mxu0
        %v982 = vadd.f32 %v918, %v981
        %v983 = vpop.f32.mrb[0].mxu0
        %984 = vmatprep.mubr.bf16.mxu0 0
        %985 = vmatmul.mubr.bf16.gmra.mrb[0].mxu0 %v421
        %v986 = vpop.f32.mrb[0].mxu0
        %v987 = vadd.f32 %v918, %v986
        %v988 = vpop.f32.mrb[0].mxu0
        %v989 = vpop.f32.mrb[0].mxu0
        %v990 = vadd.f32 %v918, %v989
        %v991 = vpop.f32.mrb[0].mxu0
        %992 = vmatprep.mubr.bf16.mxu0 0
        %993 = vmatmul.mubr.bf16.gmra.mrb[0].mxu0 %v422
        %v994 = vpop.f32.mrb[0].mxu0
        %v995 = vadd.f32 %v918, %v994
        %v996 = vpop.f32.mrb[0].mxu0
        %v997 = vpop.f32.mrb[0].mxu0
        %v998 = vadd.f32 %v918, %v997
        %v999 = vpop.f32.mrb[0].mxu0
        %1000 = vmatprep.mubr.bf16.mxu0 0
        %1001 = vmatmul.mubr.bf16.gmra.mrb[0].mxu0 %v423
        %v1002 = vpop.f32.mrb[0].mxu0
        %v1003 = vadd.f32 %v918, %v1002
        %v1004 = vpop.f32.mrb[0].mxu0
        %v1005 = vpop.f32.mrb[0].mxu0
        %v1006 = vadd.f32 %v918, %v1005
        %v1007 = vpop.f32.mrb[0].mxu0
        %1008 = vmatprep.mubr.bf16.mxu0 0
        %1009 = vmatmul.mubr.bf16.gmra.mrb[0].mxu0 %v424
        %v1010 = vpop.f32.mrb[0].mxu0
        %v1011 = vadd.f32 %v918, %v1010
        %v1012 = vpop.f32.mrb[0].mxu0
        %v1013 = vpop.f32.mrb[0].mxu0
        %v1014 = vadd.f32 %v918, %v1013
        %v1015 = vpop.f32.mrb[0].mxu0
        %1016 = vdwg.mxu0
        %v1017 = vld [vmem:[%s297] sm:$0xff]
        %v1018 = vld [vmem:[%s297 + $0x8] sm:$0xff]
        %1019 = vmatprep.subr.mxu0 0.0
        %1020 = vmatpush1.msra.mxu0 %v955
        %1021 = vmatprep.subr.mxu0 0.0
        %1022 = vmatpush1.msra.mxu0 %v958
        %1023 = vmatprep.subr.mxu0 0.0
        %1024 = vmatpush1.msra.mxu0 %v963
        %1025 = vmatprep.subr.mxu0 0.0
        %1026 = vmatpush1.msra.mxu0 %v966
        %1027 = vmatprep.subr.mxu0 0.0
        %1028 = vmatpush1.msra.mxu0 %v971
        %1029 = vmatprep.subr.mxu0 0.0
        %1030 = vmatpush1.msra.mxu0 %v974
        %1031 = vmatprep.subr.mxu0 0.0
        %1032 = vmatpush1.msra.mxu0 %v979
        %1033 = vmatprep.subr.mxu0 0.0
        %1034 = vmatpush1.msra.mxu0 %v982
        %1035 = vmatprep.subr.mxu0 0.0
        %1036 = vmatpush1.msra.mxu0 %v987
        %1037 = vmatprep.subr.mxu0 0.0
        %1038 = vmatpush1.msra.mxu0 %v990
        %1039 = vmatprep.subr.mxu0 0.0
        %1040 = vmatpush1.msra.mxu0 %v995
        %1041 = vmatprep.subr.mxu0 0.0
        %1042 = vmatpush1.msra.mxu0 %v998
        %1043 = vmatprep.subr.mxu0 0.0
        %1044 = vmatpush1.msra.mxu0 %v1003
        %1045 = vmatprep.subr.mxu0 0.0
        %1046 = vmatpush1.msra.mxu0 %v1006
        %1047 = vmatprep.subr.mxu0 0.0
        %1048 = vmatpush1.msra.mxu0 %v1011
        %1049 = vmatprep.subr.mxu0 0.0
        %1050 = vmatpush1.msra.mxu0 %v1014
        %1051 = vmatprep.subr.mxu0 0.0
        %1052 = vmatpush1.msra.mxu0 0.0
        %1053 = vmatprep.subr.mxu0 0.0
        %1054 = vmatpush1.msra.mxu0 0.0
        %1055 = vmatprep.subr.mxu0 0.0
        %1056 = vmatpush1.msra.mxu0 0.0
        %1057 = vmatprep.subr.mxu0 0.0
        %1058 = vmatpush1.msra.mxu0 0.0
        %1059 = vmatprep.subr.mxu0 0.0
        %1060 = vmatpush1.msra.mxu0 0.0
        %1061 = vmatprep.subr.mxu0 0.0
        %1062 = vmatpush1.msra.mxu0 0.0
        %1063 = vmatprep.subr.mxu0 0.0
        %1064 = vmatpush1.msra.mxu0 0.0
        %1065 = vmatprep.subr.mxu0 0.0
        %1066 = vmatpush1.msra.mxu0 0.0
        %1067 = vmatprep.subr.mxu0 0.0
        %1068 = vmatpush1.msra.mxu0 0.0
        %1069 = vmatprep.subr.mxu0 0.0
        %1070 = vmatpush1.msra.mxu0 0.0
        %1071 = vmatprep.subr.mxu0 0.0
        %1072 = vmatpush1.msra.mxu0 0.0
        %1073 = vmatprep.subr.mxu0 0.0
        %1074 = vmatpush1.msra.mxu0 0.0
        %1075 = vmatprep.subr.mxu0 0.0
        %1076 = vmatpush1.msra.mxu0 0.0
        %1077 = vmatprep.subr.mxu0 0.0
        %1078 = vmatpush1.msra.mxu0 0.0
        %1079 = vmatprep.subr.mxu0 0.0
        %1080 = vmatpush1.msra.mxu0 0.0
        %1081 = vmatprep.subr.mxu0 0.0
        %1082 = vmatpush1.msra.mxu0 0.0
        %1083 = vmatprep.mubr.f32.mxu0 0.0
        %1084 = vmatmul.mubr.f32.gmra.mrb[0].mxu0 %v1017
        %v1085 = vpop.f32.mrb[0].mxu0
        %v1086 = vadd.f32 0.0, %v1085
        %v1087 = vpop.f32.mrb[0].mxu0
        %1088 = vmatprep.mubr.f32.mxu0 0.0
        %1089 = vmatmul.mubr.f32.gmra.mrb[0].mxu0 %v1018
        %v1090 = vpop.f32.mrb[0].mxu0
        %v1091 = vadd.f32 0.0, %v1090
        %v1092 = vpop.f32.mrb[0].mxu0
        %1093 = vdwg.mxu0
        %1094 = vst [vmem:[%s341] sm:$0xff] %v1086
        %1095 = vst [vmem:[%s341 + $0x8] sm:$0xff] %v1091
        %s1096 = sand.u32 %s195, 1
        %s1097 = scalar_lea.sflag [#allocation4], %s1096
        %s1098 = sand.u32 %s195, 1
        %s1099 = smul.addr %s1098, 16
        %s1100 = scalar_lea.vmem [#allocation7], %s1099
        // Predicated region
        $region57: #{tpu_custom_call.1} parent=47 // pred_check
          %p1101 = pneg %p205
        $region58: #{tpu_custom_call.1} parent=47 // pred_check_branch
          %1103 = sbr.rel (%p1101) target = $region60
        $region59: #{tpu_custom_call.1} parent=47 // pred_region
          %s1105 = ssub.s32 256, 256
          %1106 = vsyncadd %s1097, %s1105
          %s1107 = smul.addr %s25, 2
          %s1108 = smul.addr %s1107, 128
          %s1109 = scalar_lea.hbm %s7, %s1108
          %s1110 = sshll.u32 %s1100, 4
          %s1111 = int_to_ptr.vmem [resolvable:$true] %s1110
          %1116 = dma.vmem_to_hbm [thread:$0]  %s1111, 256, %s1109, %s1097, 128, 128, 8
        $region60: #{tpu_custom_call.1} parent=47 // pred_fallthru
          _
      $region48: #{tpu_custom_call.1} parent=5 // pred_fallthru
        _
      %p1117 = scmp.le.s32.totalorder 2, %s20
      // Predicated region
      $region61: #{tpu_custom_call.1} parent=5 // pred_check
        %p1118 = pneg %p1117
      $region62: #{tpu_custom_call.1} parent=5 // pred_check_branch
        %1120 = sbr.rel (%p1118) target = $region64
      $region63: #{tpu_custom_call.1} parent=5 // pred_region
        %s1121 = ssub.s32 %s20, 2
        // Predicated region
        $region65: #{tpu_custom_call.1} parent=63 // pred_check
          %p1122 = pneg %p211
        $region66: #{tpu_custom_call.1} parent=63 // pred_check_branch
          %1124 = sbr.rel (%p1122) target = $region68
        $region67: #{tpu_custom_call.1} parent=63 // pred_region
          %s1125 = sand.u32 %s196, 1
          %s1126 = scalar_lea.sflag [#allocation4], %s1125
          %s1127 = sand.u32 %s196, 1
          %s1128 = smul.addr %s1127, 16
          %s1129 = scalar_lea.vmem [#allocation7], %s1128
          %1130 = dma.done %s1126, 256
        $region68: #{tpu_custom_call.1} parent=63 // pred_fallthru
          _
      $region64: #{tpu_custom_call.1} parent=5 // pred_fallthru
        _
    $region6: #{tpu_custom_call.1} parent=1 // loop_footer
      %s24 = sadd.s32 1, %s20
    $region7: #{tpu_custom_call.1} parent=1 // loop_footer_branch
      %19 = sbr.rel target = $region3
    $region8: #{tpu_custom_call.1} parent=1 // loop_exit
      _
    %1131 = vsyncpa [#allocation3], 1
    %s1132 = scalar_lea.sflag [#allocation3], 1
    %1133 = vsyncpa %s1132, 1
    %1134 = vsyncpa [#allocation6], 1
    %1135 = vsyncpa [#allocation4], 1
    %s1136 = scalar_lea.sflag [#allocation4], 1
    %1137 = vsyncpa %s1136, 1

</llo_original>
